<compile_context>
chip_gen: v5e
topology: v5e:2x2
jax: 0.10.0
libtpu: 0.0.40
codegen_flags: <defaults>
</compile_context>

<pallas_src>
import jax
import jax.numpy as jnp
from jax.experimental import pallas as pl
from jax.experimental.pallas import tpu as pltpu


def _round_up(a: int, b: int) -> int:
    return (a + b - 1) // b * b


def _make_conv2d_kernel(kh, kw, tile_h, strip_rows, w_in_pad, w_out_pad,
                        needs_col_pad):
    n_strips = tile_h // strip_rows
    xs_rows = strip_rows + 8          # input rows consumed per strip (8 >= kh-1)

    def kernel(w_ref, b_ref, x_ref, halo_ref, o_ref):
        # Scalar (SMEM) reads hoisted to the top: the scalar unit runs ahead
        # and nothing downstream stalls on them (no DMA wait in this body).
        bias = b_ref[0]
        w_taps = [[w_ref[i, j] for j in range(kw)] for i in range(kh)]
        # One bias splat per grid step, reused by every strip (seeding the
        # accumulator with it saves a full-tile add at the end).
        bias_tile = jnp.full((strip_rows, w_out_pad), bias, jnp.float32)
        if needs_col_pad:
            zeros_pad = jnp.zeros((xs_rows, 128), jnp.float32)

        def compute_strip(xs, r0):
            # xs: (xs_rows, w_in_pad) rows [r0, r0 + xs_rows) of this tile.
            if needs_col_pad:
                # One extra 128-lane zero block, in vregs only, so every
                # column-tap slice below is statically in-bounds (VMEM refs
                # have no runtime OOB check).
                xs = jnp.concatenate([xs, zeros_pad], axis=1)
            acc = bias_tile
            for j in range(kw):
                # One lane-shifted copy per column tap, reused by all kh row
                # taps (lane shift -> XLU, separate issue slot from the VALU).
                xj = xs[:, j:j + w_out_pad]
                for i in range(kh):
                    acc = acc + xj[i:i + strip_rows, :] * w_taps[i][j]
            o_ref[pl.ds(r0, strip_rows), :] = acc      # lane-dense store

        # All strips except the last read only from the main block.
        n_loop = n_strips - 1
        if n_loop > 0:
            if n_loop <= 8:
                unroll = True
            elif n_loop % 4 == 0:
                unroll = 4
            elif n_loop % 2 == 0:
                unroll = 2
            else:
                unroll = 1

            def strip_body(s, carry):
                r0 = pl.multiple_of(s * strip_rows, 8)
                compute_strip(x_ref[pl.ds(r0, xs_rows), :], r0)
                return carry

            jax.lax.fori_loop(0, n_loop, strip_body, 0, unroll=unroll)

        # Last strip straddles the main block and the 8-row halo block.
        r_last = tile_h - strip_rows
        xs_last = jnp.concatenate(
            [x_ref[pl.ds(r_last, strip_rows), :], halo_ref[...]], axis=0)
        compute_strip(xs_last, r_last)

    return kernel


def conv2d_pallas(x, weight, bias, *, tile_h=None):
    """Valid 2-D cross-correlation + bias (PyTorch `Conv2d` module forward)."""
    x = jnp.asarray(x, jnp.float32)
    weight = jnp.asarray(weight, jnp.float32)
    bias = jnp.asarray(bias, jnp.float32).reshape((1,))

    h_in, w_in = x.shape
    kh, kw = weight.shape
    assert kh <= h_in and kw <= w_in
    assert kh - 1 <= 8 and kw - 1 <= 128, "kernel window too large for this halo scheme"
    h_out = h_in - kh + 1
    w_out = w_in - kw + 1

    # Lane-dense output width; input width padded only to the next 128 multiple
    # (no extra 128-column DMA block).
    w_out_pad = _round_up(w_out, 128)
    w_in_pad = _round_up(w_in, 128)
    # Column taps that would slice past w_in_pad are handled by a one-block
    # zero extension in vregs inside the kernel.
    needs_col_pad = (w_out_pad + kw - 1) > w_in_pad

    halo = 8                                   # >= kh - 1, sublane aligned
    h_out8 = _round_up(h_out, 8)

    # Per-generation VMEM budget (v5e/v6e: 128 MiB; v7x: 64 MiB per TC).
    try:
        vmem_cap = int(pltpu.get_tpu_info().vmem_capacity_bytes)
    except Exception:                          # conservative (v7x-safe) default
        vmem_cap = 64 * 1024 * 1024
    budget = max(8 << 20, min(32 << 20, vmem_cap // 4))
    vmem_limit = int(min(vmem_cap // 2, 64 << 20))

    if tile_h is None:
        # Double-buffered blocks: 2 x (main input + halo input + output), f32.
        per_row = 4 * 2 * (w_in_pad + w_out_pad)
        fixed = 4 * 2 * halo * w_in_pad
        tile_h = (budget - fixed) // per_row
        tile_h = max(8, min(1024, tile_h // 8 * 8))
    tile_h = max(8, min(tile_h // 8 * 8, h_out8))

    # Rebalance tile_h so round_up(h_out, tile_h) row waste can't blow up
    # (e.g. h_out just above a multiple of tile_h).
    n_tiles = (h_out8 + tile_h - 1) // tile_h
    tile_h = _round_up((h_out8 + n_tiles - 1) // n_tiles, 8)
    assert tile_h % 8 == 0 and tile_h >= 8
    h_out_pad = n_tiles * tile_h
    h_in_pad = h_out_pad + halo                # covers the last tile's halo block

    # Strip height: fattest of 32/16/8 that divides tile_h and keeps the strip
    # working set (xs + shifted copy + acc) within ~32 vregs.
    xw = w_in_pad + (128 if needs_col_pad else 0)
    strip_rows = 8
    for cand in (32, 16):
        if tile_h % cand == 0 and 4 * (2 * (cand + 8) * xw + cand * w_out_pad) <= 32 * 4096:
            strip_rows = cand
            break

    # Single wrapper pad: width to the 128 boundary, plus the few halo rows.
    x_pad = jnp.pad(x, ((0, h_in_pad - h_in), (0, w_in_pad - w_in)))

    kernel = _make_conv2d_kernel(kh, kw, tile_h, strip_rows, w_in_pad,
                                 w_out_pad, needs_col_pad)

    tiles8 = tile_h // 8   # halo block index step (halo spec uses 8-row blocks)

    out_pad = pl.pallas_call(
        kernel,
        out_shape=jax.ShapeDtypeStruct((h_out_pad, w_out_pad), jnp.float32),
        grid_spec=pltpu.PrefetchScalarGridSpec(
            num_scalar_prefetch=0,
            grid=(n_tiles,),
            in_specs=[
                pl.BlockSpec(memory_space=pltpu.SMEM),   # weight taps (scalars)
                pl.BlockSpec(memory_space=pltpu.SMEM),   # bias (scalar)
                # Main row-tile of the padded image (auto-pipelined).
                pl.BlockSpec((tile_h, w_in_pad), lambda t: (t, 0)),
                # 8-row halo block: the rows immediately below this tile.  Same
                # array passed twice — only the halo rows are read twice.
                pl.BlockSpec((8, w_in_pad), lambda t: (t * tiles8 + tiles8, 0)),
            ],
            out_specs=pl.BlockSpec((tile_h, w_out_pad), lambda t: (t, 0)),
        ),
        compiler_params=pltpu.CompilerParams(
            # No cross-step state anymore -> safe to shard row-tiles across
            # both TensorCores on v7x.
            dimension_semantics=("parallel",),
            vmem_limit_bytes=vmem_limit,
        ),
    )(weight, bias, x_pad, x_pad)

    return out_pad[:h_out, :w_out]


def conv2d_ref(x, k, b):
    """Pure-JAX reference mirroring the PyTorch double loop (vectorized)."""
    h_in, w_in = x.shape
    kh, kw = k.shape
    h_out, w_out = h_in - kh + 1, w_in - kw + 1
    acc = jnp.zeros((h_out, w_out), jnp.float32)
    for i in range(kh):
        for j in range(kw):
            acc = acc + x[i:i + h_out, j:j + w_out] * k[i, j]
    return acc + b[0]


if __name__ == "__main__":
    key = jax.random.PRNGKey(0)
    k1, k2, k3, k4 = jax.random.split(key, 4)

    # Case 1: the module's own workload — Conv2d(size=(3, 3)) on a 16x16 image.
    w3 = 0.001 * jax.random.normal(k1, (3, 3), dtype=jnp.float32)
    b3 = jnp.zeros((1,), dtype=jnp.float32)
    x1 = jax.random.normal(k2, (16, 16), dtype=jnp.float32)
    ref1 = conv2d_ref(x1, w3, b3)

    out1a = jax.block_until_ready(conv2d_pallas(x1, w3, b3))            # default tile
    out1b = jax.block_until_ready(conv2d_pallas(x1, w3, b3, tile_h=8))  # 2 row-tiles
    assert out1a.shape == (14, 14) and out1b.shape == (14, 14)
    assert jnp.allclose(out1a, ref1, atol=1e-6, rtol=1e-5)
    assert jnp.allclose(out1b, ref1, atol=1e-6, rtol=1e-5)

    # Case 2: larger image + 5x5 kernel + nonzero bias, exercising the
    # multi-tile parallel pipeline, halo block, in-vreg column pad, multi-strip
    # loop and output cropping.
    w5 = 0.001 * jax.random.normal(k3, (5, 5), dtype=jnp.float32)
    b5 = jnp.array([0.25], dtype=jnp.float32)
    x2 = jax.random.normal(k4, (112, 200), dtype=jnp.float32)
    out2 = jax.block_until_ready(conv2d_pallas(x2, w5, b5, tile_h=32))   # 4 row-tiles
    ref2 = conv2d_ref(x2, w5, b5)
    assert out2.shape == (108, 196)
    assert jnp.allclose(out2, ref2, atol=1e-6, rtol=1e-5)

    print("KERNEL_OK")
</pallas_src>

<mosaic_0001>
module attributes {stable_mosaic.version = 11 : i64} {
  func.func @kernel(%arg0: i32, %arg1: memref<3x3xf32, #tpu.memory_space<smem>>, %arg2: memref<1xf32, #tpu.memory_space<smem>>, %arg3: memref<16x128xf32, #tpu.memory_space<vmem>>, %arg4: memref<8x128xf32, #tpu.memory_space<vmem>>, %arg5: memref<16x128xf32, #tpu.memory_space<vmem>>) attributes {dimension_semantics = [#tpu.dimension_semantics<parallel>], iteration_bounds = array<i64: 1>, scalar_prefetch = 0 : i64, scratch_operands = 0 : i64, tpu.core_type = #tpu.core_type<tc>, window_params = [{transform_indices = @transform_0, window_bounds = array<i64: 3, 3>}, {transform_indices = @transform_1, window_bounds = array<i64: 1>}, {transform_indices = @transform_2, window_bounds = array<i64: 16, 128>}, {transform_indices = @transform_3, window_bounds = array<i64: 8, 128>}, {transform_indices = @transform_4, window_bounds = array<i64: 16, 128>}]} {
    %c0 = arith.constant 0 : index
    %0 = memref.load %arg2[%c0] : memref<1xf32, #tpu.memory_space<smem>>
    %c0_0 = arith.constant 0 : index
    %c0_1 = arith.constant 0 : index
    %1 = memref.load %arg1[%c0_0, %c0_1] : memref<3x3xf32, #tpu.memory_space<smem>>
    %c0_2 = arith.constant 0 : index
    %c1 = arith.constant 1 : index
    %2 = memref.load %arg1[%c0_2, %c1] : memref<3x3xf32, #tpu.memory_space<smem>>
    %c0_3 = arith.constant 0 : index
    %c2 = arith.constant 2 : index
    %3 = memref.load %arg1[%c0_3, %c2] : memref<3x3xf32, #tpu.memory_space<smem>>
    %c1_4 = arith.constant 1 : index
    %c0_5 = arith.constant 0 : index
    %4 = memref.load %arg1[%c1_4, %c0_5] : memref<3x3xf32, #tpu.memory_space<smem>>
    %c1_6 = arith.constant 1 : index
    %c1_7 = arith.constant 1 : index
    %5 = memref.load %arg1[%c1_6, %c1_7] : memref<3x3xf32, #tpu.memory_space<smem>>
    %c1_8 = arith.constant 1 : index
    %c2_9 = arith.constant 2 : index
    %6 = memref.load %arg1[%c1_8, %c2_9] : memref<3x3xf32, #tpu.memory_space<smem>>
    %c2_10 = arith.constant 2 : index
    %c0_11 = arith.constant 0 : index
    %7 = memref.load %arg1[%c2_10, %c0_11] : memref<3x3xf32, #tpu.memory_space<smem>>
    %c2_12 = arith.constant 2 : index
    %c1_13 = arith.constant 1 : index
    %8 = memref.load %arg1[%c2_12, %c1_13] : memref<3x3xf32, #tpu.memory_space<smem>>
    %c2_14 = arith.constant 2 : index
    %c2_15 = arith.constant 2 : index
    %9 = memref.load %arg1[%c2_14, %c2_15] : memref<3x3xf32, #tpu.memory_space<smem>>
    %10 = vector.broadcast %0 : f32 to vector<16x128xf32>
    %cst = arith.constant 0.000000e+00 : f32
    %11 = vector.broadcast %cst : f32 to vector<24x128xf32>
    %c0_16 = arith.constant 0 : index
    %c0_17 = arith.constant 0 : index
    %12 = vector.load %arg3[%c0_16, %c0_17] : memref<16x128xf32, #tpu.memory_space<vmem>>, vector<16x128xf32>
    %c0_18 = arith.constant 0 : index
    %c0_19 = arith.constant 0 : index
    %13 = vector.load %arg4[%c0_18, %c0_19] : memref<8x128xf32, #tpu.memory_space<vmem>>, vector<8x128xf32>
    %14 = tpu.concatenate %12, %13 in 0 : vector<16x128xf32>, vector<8x128xf32> -> vector<24x128xf32>
    %15 = tpu.concatenate %14, %11 in 1 : vector<24x128xf32>, vector<24x128xf32> -> vector<24x256xf32>
    %16 = vector.extract_strided_slice %15 {offsets = [0, 0], sizes = [24, 128], strides = [1, 1]} : vector<24x256xf32> to vector<24x128xf32>
    %17 = vector.extract_strided_slice %16 {offsets = [0, 0], sizes = [16, 128], strides = [1, 1]} : vector<24x128xf32> to vector<16x128xf32>
    %18 = vector.broadcast %1 : f32 to vector<16x128xf32>
    %19 = arith.mulf %17, %18 : vector<16x128xf32>
    %20 = arith.addf %10, %19 : vector<16x128xf32>
    %21 = vector.extract_strided_slice %16 {offsets = [1, 0], sizes = [16, 128], strides = [1, 1]} : vector<24x128xf32> to vector<16x128xf32>
    %22 = vector.broadcast %4 : f32 to vector<16x128xf32>
    %23 = arith.mulf %21, %22 : vector<16x128xf32>
    %24 = arith.addf %20, %23 : vector<16x128xf32>
    %25 = vector.extract_strided_slice %16 {offsets = [2, 0], sizes = [16, 128], strides = [1, 1]} : vector<24x128xf32> to vector<16x128xf32>
    %26 = vector.broadcast %7 : f32 to vector<16x128xf32>
    %27 = arith.mulf %25, %26 : vector<16x128xf32>
    %28 = arith.addf %24, %27 : vector<16x128xf32>
    %29 = vector.extract_strided_slice %15 {offsets = [0, 1], sizes = [24, 128], strides = [1, 1]} : vector<24x256xf32> to vector<24x128xf32>
    %30 = vector.extract_strided_slice %29 {offsets = [0, 0], sizes = [16, 128], strides = [1, 1]} : vector<24x128xf32> to vector<16x128xf32>
    %31 = vector.broadcast %2 : f32 to vector<16x128xf32>
    %32 = arith.mulf %30, %31 : vector<16x128xf32>
    %33 = arith.addf %28, %32 : vector<16x128xf32>
    %34 = vector.extract_strided_slice %29 {offsets = [1, 0], sizes = [16, 128], strides = [1, 1]} : vector<24x128xf32> to vector<16x128xf32>
    %35 = vector.broadcast %5 : f32 to vector<16x128xf32>
    %36 = arith.mulf %34, %35 : vector<16x128xf32>
    %37 = arith.addf %33, %36 : vector<16x128xf32>
    %38 = vector.extract_strided_slice %29 {offsets = [2, 0], sizes = [16, 128], strides = [1, 1]} : vector<24x128xf32> to vector<16x128xf32>
    %39 = vector.broadcast %8 : f32 to vector<16x128xf32>
    %40 = arith.mulf %38, %39 : vector<16x128xf32>
    %41 = arith.addf %37, %40 : vector<16x128xf32>
    %42 = vector.extract_strided_slice %15 {offsets = [0, 2], sizes = [24, 128], strides = [1, 1]} : vector<24x256xf32> to vector<24x128xf32>
    %43 = vector.extract_strided_slice %42 {offsets = [0, 0], sizes = [16, 128], strides = [1, 1]} : vector<24x128xf32> to vector<16x128xf32>
    %44 = vector.broadcast %3 : f32 to vector<16x128xf32>
    %45 = arith.mulf %43, %44 : vector<16x128xf32>
    %46 = arith.addf %41, %45 : vector<16x128xf32>
    %47 = vector.extract_strided_slice %42 {offsets = [1, 0], sizes = [16, 128], strides = [1, 1]} : vector<24x128xf32> to vector<16x128xf32>
    %48 = vector.broadcast %6 : f32 to vector<16x128xf32>
    %49 = arith.mulf %47, %48 : vector<16x128xf32>
    %50 = arith.addf %46, %49 : vector<16x128xf32>
    %51 = vector.extract_strided_slice %42 {offsets = [2, 0], sizes = [16, 128], strides = [1, 1]} : vector<24x128xf32> to vector<16x128xf32>
    %52 = vector.broadcast %9 : f32 to vector<16x128xf32>
    %53 = arith.mulf %51, %52 : vector<16x128xf32>
    %54 = arith.addf %50, %53 : vector<16x128xf32>
    %c0_20 = arith.constant 0 : index
    %c0_21 = arith.constant 0 : index
    %55 = vector.load %arg5[%c0_20, %c0_21] : memref<16x128xf32, #tpu.memory_space<vmem>>, vector<16x128xf32>
    tpu.vector_store %arg5[%c0_20, %c0_21], %54 {strides = array<i32>} : memref<16x128xf32, #tpu.memory_space<vmem>>, vector<16x128xf32>,
    return
  }
  func.func @transform_0(%arg0: i32) -> (i32, i32) {
    %c0_i32 = arith.constant 0 : i32
    %c0_i32_0 = arith.constant 0 : i32
    %c0_i32_1 = arith.constant 0 : i32
    return %c0_i32, %c0_i32_0 : i32, i32
  }
  func.func @transform_1(%arg0: i32) -> i32 {
    %c0_i32 = arith.constant 0 : i32
    %c0_i32_0 = arith.constant 0 : i32
    return %c0_i32 : i32
  }
  func.func @transform_2(%arg0: i32) -> (i32, i32) {
    %c0_i32 = arith.constant 0 : i32
    %c0_i32_0 = arith.constant 0 : i32
    return %arg0, %c0_i32 : i32, i32
  }
  func.func @transform_3(%arg0: i32) -> (i32, i32) {
    %c2_i32 = arith.constant 2 : i32
    %0 = arith.muli %arg0, %c2_i32 : i32
    %c2_i32_0 = arith.constant 2 : i32
    %1 = arith.addi %0, %c2_i32_0 : i32
    %c0_i32 = arith.constant 0 : i32
    %c0_i32_1 = arith.constant 0 : i32
    return %1, %c0_i32 : i32, i32
  }
  func.func @transform_4(%arg0: i32) -> (i32, i32) {
    %c0_i32 = arith.constant 0 : i32
    %c0_i32_0 = arith.constant 0 : i32
    return %arg0, %c0_i32 : i32, i32
  }
}

</mosaic_0001>

<llo_original>
// kernel: tpu_custom_call.1
$region0: #{tpu_custom_call.1}
  #allocation0 [shape = 'u32[]', space=smem, size = 0x4, offset = 0x4, fixed_abs, tag = 'smem constant byte address 0x4 - core index']
  #allocation1 [shape = 'u32[72,128]{1,0:T(1,128)}', space=vmem, size = 0x9000, scoped, tag = 'internal scratch']
  #allocation2 [shape = 'f32[1]{0:T(128)S(6)}', space=smem, size = 0x200, scoped, tag = 'scoped memory for tpu_custom_call.1']
  %s0 = inlined_call_operand.hbm [shape: f32[3,3], index: 0, kind: input, shape index: {}]
  %s1 = inlined_call_operand.<no memory space> [shape: f32[1], index: 1, kind: input, shape index: {}]
  %s2 = inlined_call_operand.hbm [shape: f32[24,128], index: 2, kind: input, shape index: {}]
  %s3 = inlined_call_operand.hbm [shape: f32[24,128], index: 3, kind: input, shape index: {}]
  %s4 = inlined_call_operand.hbm [shape: f32[16,128], index: 4, kind: output, shape index: {}]
  %s5 = sld [smem:[#allocation0]]
  $region38: #{tpu_custom_call.1} parent=0
    _
  %s7 = ssub.s32 1, %s5
  %s8 = scalar_select 0, %s7, %s5
  %9 = sst [smem:[#allocation2]] %s1
  $region1: #{tpu_custom_call.1} parent=0
    #allocation3 [shape = 'u8[2048]{0}', space=smem, size = 0x800, scoped, tag = 'input window, operand 0, single buffered']
    #allocation4 [shape = 's32[1]{0}', space=sflag, size = 0x4, scoped, tag = 'scoped memory for tpu_custom_call.1']
    #allocation5 [shape = 's32[1]{0}', space=sflag, size = 0x4, scoped, tag = 'scoped memory for tpu_custom_call.1']
    #allocation6 [shape = 's32[1]{0}', space=sflag, size = 0x4, scoped, tag = 'scoped memory for tpu_custom_call.1']
    #allocation7 [shape = 'u8[8192]{0}', space=vmem, size = 0x2000, scoped, tag = 'input window, operand 2, single buffered']
    #allocation8 [shape = 'u8[4096]{0}', space=vmem, size = 0x1000, scoped, tag = 'input window, operand 3, single buffered']
    #allocation9 [shape = 's32[1]{0}', space=sflag, size = 0x4, scoped, tag = 'scoped memory for tpu_custom_call.1']
    #allocation10 [shape = 'u8[8192]{0}', space=vmem, size = 0x2000, scoped, tag = 'output window, operand 0, single buffered']
    %10 = vsyncpa [#allocation6], 0
    %11 = vsyncpa [#allocation4], 0
    %12 = vsyncpa [#allocation9], 0
    %13 = vsyncpa [#allocation5], 0
    // Predicated region
    $region2: #{tpu_custom_call.1} parent=1 // pred_check
      _
    $region3: #{tpu_custom_call.1} parent=1 // pred_check_branch
      %15 = sbr.rel (0) target = $region5
    $region4: #{tpu_custom_call.1} parent=1 // pred_region
      %17 = vsyncadd [#allocation6], 0
      %s19 = sshll.u32 %s0, 4
      %s20 = int_to_ptr.hbm [resolvable:$true] %s19
      %22 = dma.hbm_to_smem %s20, 64, [#allocation3], [#allocation6]
    $region5: #{tpu_custom_call.1} parent=1 // pred_fallthru
      _
    // Predicated region
    $region6: #{tpu_custom_call.1} parent=1 // pred_check
      _
    $region7: #{tpu_custom_call.1} parent=1 // pred_check_branch
      %24 = sbr.rel (0) target = $region9
    $region8: #{tpu_custom_call.1} parent=1 // pred_region
      _
    $region9: #{tpu_custom_call.1} parent=1 // pred_fallthru
      _
    // Predicated region
    $region10: #{tpu_custom_call.1} parent=1 // pred_check
      _
    $region11: #{tpu_custom_call.1} parent=1 // pred_check_branch
      %26 = sbr.rel (0) target = $region13
    $region12: #{tpu_custom_call.1} parent=1 // pred_region
      %28 = vsyncadd [#allocation4], 0
      %s29 = sshll.u32 %s2, 4
      %s30 = int_to_ptr.hbm [resolvable:$true] %s29
      %s31 = sshll.u32 [#allocation7], 4
      %s32 = int_to_ptr.vmem [resolvable:$true] %s31
      %37 = dma.hbm_to_vmem [thread:$0]  %s30, 256, %s32, [#allocation4], 128, 128, 8
    $region13: #{tpu_custom_call.1} parent=1 // pred_fallthru
      _
    // Predicated region
    $region14: #{tpu_custom_call.1} parent=1 // pred_check
      _
    $region15: #{tpu_custom_call.1} parent=1 // pred_check_branch
      %39 = sbr.rel (0) target = $region17
    $region16: #{tpu_custom_call.1} parent=1 // pred_region
      %s40 = smul.u32 0, 2
      %s41 = sadd.s32 %s40, 2
      %43 = vsyncadd [#allocation9], 0
      %s44 = smul.addr %s41, 8
      %s45 = scalar_lea.hbm %s3, %s44
      %s47 = sshll.u32 %s45, 4
      %s48 = int_to_ptr.hbm [resolvable:$true] %s47
      %s49 = sshll.u32 [#allocation8], 4
      %s50 = int_to_ptr.vmem [resolvable:$true] %s49
      %52 = dma.hbm_to_vmem [thread:$0]  %s48, 128, %s50, [#allocation9]
    $region17: #{tpu_custom_call.1} parent=1 // pred_fallthru
      _
    // Predicated region
    $region18: #{tpu_custom_call.1} parent=1 // pred_check
      _
    $region19: #{tpu_custom_call.1} parent=1 // pred_check_branch
      %54 = sbr.rel (0) target = $region21
    $region20: #{tpu_custom_call.1} parent=1 // pred_region
      %56 = dma.done [#allocation6], 64
    $region21: #{tpu_custom_call.1} parent=1 // pred_fallthru
      _
    // Predicated region
    $region22: #{tpu_custom_call.1} parent=1 // pred_check
      _
    $region23: #{tpu_custom_call.1} parent=1 // pred_check_branch
      %58 = sbr.rel (0) target = $region25
    $region24: #{tpu_custom_call.1} parent=1 // pred_region
      %60 = dma.done [#allocation4], 256
    $region25: #{tpu_custom_call.1} parent=1 // pred_fallthru
      _
    // Predicated region
    $region26: #{tpu_custom_call.1} parent=1 // pred_check
      _
    $region27: #{tpu_custom_call.1} parent=1 // pred_check_branch
      %62 = sbr.rel (0) target = $region29
    $region28: #{tpu_custom_call.1} parent=1 // pred_region
      %64 = dma.done [#allocation9], 128
    $region29: #{tpu_custom_call.1} parent=1 // pred_fallthru
      _
    %65 = sfence
    %s66 = smul.u32 0, 2
    %s67 = sadd.s32 %s66, 2
    %s68 = sld [smem:[#allocation2]]
    %s69 = sld [smem:[#allocation3]]
    %s70 = sld [smem:[#allocation3 + $0x1]]
    %s71 = sld [smem:[#allocation3 + $0x2]]
    %s72 = sld [smem:[#allocation3 + $0x80]]
    %s73 = sld [smem:[#allocation3 + $0x81]]
    %s74 = sld [smem:[#allocation3 + $0x82]]
    %s75 = sld [smem:[#allocation3 + $0x100]]
    %s76 = sld [smem:[#allocation3 + $0x101]]
    %s77 = sld [smem:[#allocation3 + $0x102]]
    %v78 = vstv %s68
    %v79 = vld [vmem:[#allocation7] sm:$0xff]
    %v80 = vld [vmem:[#allocation7 + $0x8] sm:$0xff]
    %v81 = vld [vmem:[#allocation8] sm:$0xff]
    %v82 = vstv %s69
    %v83 = vmul.f32 %v79, %v82
    %v84 = vmul.f32 %v80, %v82
    %v85 = vadd.f32 %v78, %v83
    %v86 = vadd.f32 %v78, %v84
    %v87 = vstv %s72
    %v88 = vmul.f32 %v79, %v87
    %v89 = vmul.f32 %v80, %v87
    %v90 = vmul.f32 %v81, %v87
    %vm94 = vcmask 1046528
    %v95 = vrot.slane %v88, 1
    %v96 = vrot.slane %v89, 1
    %v97 = vsel %vm94, %v95, %v96
    %v98 = vrot.slane %v90, 1
    %v99 = vsel %vm94, %v96, %v98
    %v102 = vadd.f32 %v85, %v97
    %v103 = vadd.f32 %v86, %v99
    %v104 = vstv %s75
    %v105 = vmul.f32 %v79, %v104
    %v106 = vmul.f32 %v80, %v104
    %v107 = vmul.f32 %v81, %v104
    %vm111 = vcmask 1045504
    %v112 = vrot.slane %v105, 2
    %v113 = vrot.slane %v106, 2
    %v114 = vsel %vm111, %v112, %v113
    %v115 = vrot.slane %v107, 2
    %v116 = vsel %vm111, %v113, %v115
    %v119 = vadd.f32 %v102, %v114
    %v120 = vadd.f32 %v103, %v116
    %v121 = vstv %s70
    %v122 = vmul.f32 %v79, %v121
    %v123 = vmul.f32 %v121, 0.0
    %v124 = vmul.f32 %v80, %v121
    %128 = vrot.lane.b32.xlu0 %v122, 127
    %v129 = vpop.permute.xlu0 %128
    %130 = vrot.lane.b32.xlu0 %v123, 127
    %v131 = vpop.permute.xlu0 %130
    %132 = vrot.lane.b32.xlu0 %v124, 127
    %v133 = vpop.permute.xlu0 %132
    %vm134 = vcmask 1039360
    %v135 = vsel %vm134, %v129, %v131
    %v136 = vsel %vm134, %v133, %v131
    %v139 = vadd.f32 %v119, %v135
    %v140 = vadd.f32 %v120, %v136
    %v141 = vstv %s73
    %v142 = vmul.f32 %v79, %v141
    %v143 = vmul.f32 %v141, 0.0
    %v144 = vmul.f32 %v80, %v141
    %v145 = vmul.f32 %v81, %v141
    %v150 = vrot.slane %v142, 1
    %v151 = vrot.slane %v144, 1
    %v152 = vsel %vm94, %v150, %v151
    %v153 = vrot.slane %v143, 1
    %v154 = vsel %vm94, %v153, %v153
    %v155 = vrot.slane %v145, 1
    %v156 = vsel %vm94, %v151, %v155
    %157 = vrot.lane.b32.xlu0 %v152, 127
    %v158 = vpop.permute.xlu0 %157
    %159 = vrot.lane.b32.xlu0 %v154, 127
    %v160 = vpop.permute.xlu0 %159
    %161 = vrot.lane.b32.xlu0 %v156, 127
    %v162 = vpop.permute.xlu0 %161
    %v163 = vsel %vm134, %v158, %v160
    %v164 = vsel %vm134, %v162, %v160
    %v167 = vadd.f32 %v139, %v163
    %v168 = vadd.f32 %v140, %v164
    %v169 = vstv %s76
    %v170 = vmul.f32 %v79, %v169
    %v171 = vmul.f32 %v169, 0.0
    %v172 = vmul.f32 %v80, %v169
    %v173 = vmul.f32 %v81, %v169
    %v178 = vrot.slane %v170, 2
    %v179 = vrot.slane %v172, 2
    %v180 = vsel %vm111, %v178, %v179
    %v181 = vrot.slane %v171, 2
    %v182 = vsel %vm111, %v181, %v181
    %v183 = vrot.slane %v173, 2
    %v184 = vsel %vm111, %v179, %v183
    %185 = vrot.lane.b32.xlu0 %v180, 127
    %v186 = vpop.permute.xlu0 %185
    %187 = vrot.lane.b32.xlu0 %v182, 127
    %v188 = vpop.permute.xlu0 %187
    %189 = vrot.lane.b32.xlu0 %v184, 127
    %v190 = vpop.permute.xlu0 %189
    %v191 = vsel %vm134, %v186, %v188
    %v192 = vsel %vm134, %v190, %v188
    %v195 = vadd.f32 %v167, %v191
    %v196 = vadd.f32 %v168, %v192
    %v197 = vstv %s71
    %v198 = vmul.f32 %v79, %v197
    %v199 = vmul.f32 %v197, 0.0
    %v200 = vmul.f32 %v80, %v197
    %204 = vrot.lane.b32.xlu0 %v198, 126
    %v205 = vpop.permute.xlu0 %204
    %206 = vrot.lane.b32.xlu0 %v199, 126
    %v207 = vpop.permute.xlu0 %206
    %208 = vrot.lane.b32.xlu0 %v200, 126
    %v209 = vpop.permute.xlu0 %208
    %vm210 = vcmask 1031168
    %v211 = vsel %vm210, %v205, %v207
    %v212 = vsel %vm210, %v209, %v207
    %v215 = vadd.f32 %v195, %v211
    %v216 = vadd.f32 %v196, %v212
    %v217 = vstv %s74
    %v218 = vmul.f32 %v79, %v217
    %v219 = vmul.f32 %v217, 0.0
    %v220 = vmul.f32 %v80, %v217
    %v221 = vmul.f32 %v81, %v217
    %v226 = vrot.slane %v218, 1
    %v227 = vrot.slane %v220, 1
    %v228 = vsel %vm94, %v226, %v227
    %v229 = vrot.slane %v219, 1
    %v230 = vsel %vm94, %v229, %v229
    %v231 = vrot.slane %v221, 1
    %v232 = vsel %vm94, %v227, %v231
    %233 = vrot.lane.b32.xlu0 %v228, 126
    %v234 = vpop.permute.xlu0 %233
    %235 = vrot.lane.b32.xlu0 %v230, 126
    %v236 = vpop.permute.xlu0 %235
    %237 = vrot.lane.b32.xlu0 %v232, 126
    %v238 = vpop.permute.xlu0 %237
    %v239 = vsel %vm210, %v234, %v236
    %v240 = vsel %vm210, %v238, %v236
    %v243 = vadd.f32 %v215, %v239
    %v244 = vadd.f32 %v216, %v240
    %v245 = vstv %s77
    %v246 = vmul.f32 %v79, %v245
    %v247 = vmul.f32 %v245, 0.0
    %v248 = vmul.f32 %v80, %v245
    %v249 = vmul.f32 %v81, %v245
    %v254 = vrot.slane %v246, 2
    %v255 = vrot.slane %v248, 2
    %v256 = vsel %vm111, %v254, %v255
    %v257 = vrot.slane %v247, 2
    %v258 = vsel %vm111, %v257, %v257
    %v259 = vrot.slane %v249, 2
    %v260 = vsel %vm111, %v255, %v259
    %261 = vrot.lane.b32.xlu0 %v256, 126
    %v262 = vpop.permute.xlu0 %261
    %263 = vrot.lane.b32.xlu0 %v258, 126
    %v264 = vpop.permute.xlu0 %263
    %265 = vrot.lane.b32.xlu0 %v260, 126
    %v266 = vpop.permute.xlu0 %265
    %v267 = vsel %vm210, %v262, %v264
    %v268 = vsel %vm210, %v266, %v264
    %v271 = vadd.f32 %v243, %v267
    %v272 = vadd.f32 %v244, %v268
    %273 = vst [vmem:[#allocation10] sm:$0xff] %v271
    %274 = vst [vmem:[#allocation10 + $0x8] sm:$0xff] %v272
    // Predicated region
    $region30: #{tpu_custom_call.1} parent=1 // pred_check
      _
    $region31: #{tpu_custom_call.1} parent=1 // pred_check_branch
      %276 = sbr.rel (0) target = $region33
    $region32: #{tpu_custom_call.1} parent=1 // pred_region
      %278 = vsyncadd [#allocation5], 0
      %s279 = sshll.u32 [#allocation10], 4
      %s280 = int_to_ptr.vmem [resolvable:$true] %s279
      %s281 = sshll.u32 %s4, 4
      %s282 = int_to_ptr.hbm [resolvable:$true] %s281
      %287 = dma.vmem_to_hbm [thread:$0]  %s280, 256, %s282, [#allocation5], 128, 128, 8
    $region33: #{tpu_custom_call.1} parent=1 // pred_fallthru
      _
    // Predicated region
    $region34: #{tpu_custom_call.1} parent=1 // pred_check
      _
    $region35: #{tpu_custom_call.1} parent=1 // pred_check_branch
      %289 = sbr.rel (0) target = $region37
    $region36: #{tpu_custom_call.1} parent=1 // pred_region
      %291 = dma.done [#allocation5], 256
    $region37: #{tpu_custom_call.1} parent=1 // pred_fallthru
      _
    %292 = vsyncpa [#allocation4], 1
    %293 = vsyncpa [#allocation9], 1
    %294 = vsyncpa [#allocation5], 1
    %295 = vsyncpa [#allocation6], 1

</llo_original>
